<compile_context>
chip_gen: v6e
topology: v6e:2x2x1
jax: 0.10.0
libtpu: 0.0.40
codegen_flags: <defaults>
</compile_context>

<pallas_src>
import functools

import jax
import jax.numpy as jnp
from jax.experimental import pallas as pl
from jax.experimental.pallas import tpu as pltpu


# --------------------------------------------------------------------------- helpers
def _round_up(x, m):
    return ((x + m - 1) // m) * m


def _pick_tile(dim, candidates):
    """Largest candidate tile that evenly divides dim (dims are pre-padded)."""
    for c in candidates:
        if dim % c == 0:
            return c
    return dim


def _pad_gates(w, H, H_pad):
    """(R, 4H) -> (R, 4*H_pad): each gate gets its own 128-aligned lane block."""
    parts = [jnp.pad(w[:, k * H:(k + 1) * H], ((0, 0), (0, H_pad - H))) for k in range(4)]
    return jnp.concatenate(parts, axis=1)


def _vmem_limit(resident_bytes):
    """Explicit scoped-VMEM budget: resident blocks + headroom, floored at 16 MiB."""
    return int(max(resident_bytes + (4 << 20), 16 << 20))


# --------------------------------------------------------------------------- kernels
def matmul_bias_kernel(x_ref, w_ref, b_ref, out_ref):
    """(TILE_M, K) x (K, TILE_N) + bias, f32 accumulation on the MXU."""
    out_ref[...] = (jnp.dot(x_ref[...], w_ref[...], preferred_element_type=jnp.float32)
                    + b_ref[...])


def masked_matmul_bias_kernel(mask_ref, x_ref, w_ref, b_ref, out_ref):
    """Same as above with a fused (TILE_M, 1) row-validity mask (free VPU work)."""
    acc = (jnp.dot(x_ref[...], w_ref[...], preferred_element_type=jnp.float32)
           + b_ref[...])
    out_ref[...] = acc * mask_ref[...]


def lstm_seq_kernel(preact_ref, whh_ref, h_out_ref, h_scr, c_scr, *,
                    hidden_pad, batch_pad, steps_per_block):
    """K LSTM time steps per grid iteration; only h @ W_hh^T is computed per step.

    preact_ref: (K*B_pad, 4*H_pad) f32 gate pre-activations (x @ W_ih^T + b), hoisted.
    whh_ref:    (H_pad, 4*H_pad) bf16, loop-invariant.
    h_out_ref:  (K*B_pad, H_pad) bf16, flat time-major hidden-state slab.
    h_scr/c_scr: (B_pad, H_pad) f32 recurrent state, persists across grid iterations.
    """
    t = pl.program_id(0)

    @pl.when(t == 0)
    def _():
        h_scr[...] = jnp.zeros_like(h_scr)
        c_scr[...] = jnp.zeros_like(c_scr)

    Hp = hidden_pad
    Bp = batch_pad
    h = h_scr[...]
    c = c_scr[...]
    # Static Python unroll over the K steps in this block (static slice starts give the
    # LLO scheduler cross-step visibility to overlap the next preact load with the
    # serial h-chain; K is small so live ranges stay bounded).
    for k in range(steps_per_block):
        pre = preact_ref[pl.ds(k * Bp, Bp), :]                       # (B_pad, 4*H_pad) f32
        gates = pre + jnp.dot(h.astype(jnp.bfloat16), whh_ref[...],
                              preferred_element_type=jnp.float32)
        i_g = jax.nn.sigmoid(gates[:, 0 * Hp:1 * Hp])
        f_g = jax.nn.sigmoid(gates[:, 1 * Hp:2 * Hp])
        g_g = jnp.tanh(gates[:, 2 * Hp:3 * Hp])
        o_g = jax.nn.sigmoid(gates[:, 3 * Hp:4 * Hp])
        c = f_g * c + i_g * g_g
        h = o_g * jnp.tanh(c)
        h_out_ref[pl.ds(k * Bp, Bp), :] = h.astype(h_out_ref.dtype)  # bf16 writeback
    h_scr[...] = h
    c_scr[...] = c


# --------------------------------------------------------------------------- callers
def _tiled_matmul_bias(x, w, b, *, tile_m, tile_n, row_mask=None, out_dtype=jnp.float32):
    """out = (x @ w + b) [* row_mask], tiled with the weight tile on the OUTER grid axis
    so each (K, TILE_N) weight block stays VMEM-resident across the inner row sweep."""
    M, Kdim = x.shape
    N = w.shape[1]
    grid = (N // tile_n, M // tile_m)        # (weight-tile outer/slow, row-tile inner/fast)

    in_specs = []
    args = []
    if row_mask is not None:
        in_specs.append(pl.BlockSpec((tile_m, 1), lambda n, m: (m, 0)))
        args.append(row_mask)
        kernel = masked_matmul_bias_kernel
    else:
        kernel = matmul_bias_kernel
    in_specs += [
        pl.BlockSpec((tile_m, Kdim), lambda n, m: (m, 0)),           # row tile
        pl.BlockSpec((Kdim, tile_n), lambda n, m: (0, n)),           # weight tile (resident)
        pl.BlockSpec((1, tile_n), lambda n, m: (0, n)),              # bias tile
    ]
    args += [x, w, b]

    out_itemsize = jnp.dtype(out_dtype).itemsize
    resident = (2 * (tile_m * Kdim * x.dtype.itemsize
                     + Kdim * tile_n * w.dtype.itemsize
                     + tile_n * b.dtype.itemsize
                     + (tile_m * row_mask.dtype.itemsize if row_mask is not None else 0))
                + 2 * tile_m * tile_n * out_itemsize)

    return pl.pallas_call(
        kernel,
        out_shape=jax.ShapeDtypeStruct((M, N), out_dtype),
        grid_spec=pltpu.PrefetchScalarGridSpec(
            num_scalar_prefetch=0,
            grid=grid,
            in_specs=in_specs,
            out_specs=pl.BlockSpec((tile_m, tile_n), lambda n, m: (m, n)),
        ),
        compiler_params=pltpu.CompilerParams(
            dimension_semantics=("parallel", "parallel"),   # both axes shardable (2 TCs on v7x)
            vmem_limit_bytes=_vmem_limit(resident)),
    )(*args)


def _run_lstm(preact, whh_t, *, B_pad, H_pad, K, n_blocks, single_buffer_weights):
    """Serial LSTM recurrence over n_blocks*K steps; writes flat (M, H_pad) bf16 h."""
    M = n_blocks * K * B_pad
    whh_kwargs = {"pipeline_mode": pl.Buffered(1)} if single_buffer_weights else {}
    whh_bufs = 1 if single_buffer_weights else 2
    resident = (2 * K * B_pad * 4 * H_pad * 4          # preact blocks (double-buffered, f32)
                + whh_bufs * H_pad * 4 * H_pad * 2     # W_hh^T (bf16)
                + 2 * K * B_pad * H_pad * 2            # h output blocks (bf16)
                + 2 * B_pad * H_pad * 4)               # h/c scratch (f32)
    kernel = functools.partial(lstm_seq_kernel, hidden_pad=H_pad, batch_pad=B_pad,
                               steps_per_block=K)
    return pl.pallas_call(
        kernel,
        out_shape=jax.ShapeDtypeStruct((M, H_pad), jnp.bfloat16),
        grid_spec=pltpu.PrefetchScalarGridSpec(
            num_scalar_prefetch=0,
            grid=(n_blocks,),
            in_specs=[
                pl.BlockSpec((K * B_pad, 4 * H_pad), lambda t: (t, 0)),      # gate preacts
                pl.BlockSpec((H_pad, 4 * H_pad), lambda t: (0, 0), **whh_kwargs),  # W_hh^T
            ],
            out_specs=pl.BlockSpec((K * B_pad, H_pad), lambda t: (t, 0)),
            scratch_shapes=[pltpu.VMEM((B_pad, H_pad), jnp.float32),         # h state
                            pltpu.VMEM((B_pad, H_pad), jnp.float32)],        # c state
        ),
        compiler_params=pltpu.CompilerParams(
            dimension_semantics=("arbitrary",),                              # recurrent
            vmem_limit_bytes=_vmem_limit(resident)),
    )(preact, whh_t)


# --------------------------------------------------------------------------- wrapper
def decoder_rnn_forward(params, features, captions, lengths):
    """Pallas implementation of DecoderRNN.forward.

    Returns (predictions, packed):
      predictions: (B, max(lengths), V) batch-first padded logits (for parity checks).
      packed:      (sum(lengths), V) time-major packed logits, equivalent to
                   torch pack_padded_sequence(predictions, lengths, batch_first=True).data
                   (gathered straight from the flat time-major kernel output).
    """
    B, E = features.shape
    E_pad, H_pad, V_pad = params["E_pad"], params["H_pad"], params["V_pad"]
    V = params["V"]
    T = captions.shape[1] - 1
    S = T + 1                                    # step 0 = init_hidden_state(features)
    K = min(4, S)                                # LSTM time steps per grid iteration
    S_pad = _round_up(S, K)
    B_pad = _round_up(max(B, 8), 8)
    M = S_pad * B_pad                            # flat time-major row count

    # Tile sizes (all padded dims, so the picks always succeed).  TILE_M up to 256 fills
    # the 256x256 MXU on v6e/v7x; at toy sizes it degrades gracefully to M itself.
    TILE_M = _pick_tile(M, (256, 128, 64, 32, 16, 8))
    TILE_NG = _pick_tile(4 * H_pad, (512, 256, 128))
    TILE_NV = _pick_tile(V_pad, (512, 256, 128))

    # ---- time-major step inputs: step 0 = image features, steps 1..T = embeddings ----
    feat = jnp.pad(features.astype(jnp.float32),
                   ((0, B_pad - B), (0, E_pad - E))).astype(jnp.bfloat16)
    emb = params["embed_p"][captions[:, :T]]                      # (B, T, E_pad) bf16
    emb = jnp.transpose(jnp.pad(emb, ((0, B_pad - B), (0, 0), (0, 0))), (1, 0, 2))
    x_seq = jnp.concatenate(
        [feat[None], emb, jnp.zeros((S_pad - S, B_pad, E_pad), jnp.bfloat16)], axis=0)
    x_flat = x_seq.reshape(M, E_pad)                              # flat, time-major

    # ---- 1) hoisted input projection: gate pre-activations for ALL steps -------------
    preact = _tiled_matmul_bias(x_flat, params["wih_t"], params["b"],
                                tile_m=TILE_M, tile_n=TILE_NG, out_dtype=jnp.float32)

    # ---- 2) serial LSTM recurrence (only h @ W_hh^T per step) ------------------------
    try:
        h_flat = _run_lstm(preact, params["whh_t"], B_pad=B_pad, H_pad=H_pad, K=K,
                           n_blocks=S_pad // K, single_buffer_weights=True)
    except Exception:
        # Fallback if pl.Buffered(1) is rejected by this Pallas build: default
        # double-buffering of the loop-invariant weight (correct, slightly more VMEM).
        h_flat = _run_lstm(preact, params["whh_t"], B_pad=B_pad, H_pad=H_pad, K=K,
                           n_blocks=S_pad // K, single_buffer_weights=False)

    # ---- 3) vocab projection with fused length mask -----------------------------------
    # Row-validity mask over the flat time-major layout (O(M) wrapper work, vs O(M*V)
    # if it were applied to the logits afterwards).  Row r = step*B_pad + batch_row;
    # valid iff 1 <= step <= T, batch_row < B, and (step-1) < lengths[batch_row].
    lengths_arr = jnp.asarray(lengths, jnp.int32)
    row = jnp.arange(M, dtype=jnp.int32)
    s_idx = row // B_pad
    b_idx = row % B_pad
    len_per_row = jnp.pad(lengths_arr, (0, B_pad - B))[b_idx]
    valid = (s_idx >= 1) & (s_idx <= T) & (b_idx < B) & ((s_idx - 1) < len_per_row)
    row_mask = valid.astype(jnp.float32)[:, None]                 # (M, 1)

    logits_flat = _tiled_matmul_bias(h_flat, params["wp_t"], params["bp"],
                                     tile_m=TILE_M, tile_n=TILE_NV,
                                     row_mask=row_mask, out_dtype=jnp.float32)

    # ---- 4) outputs --------------------------------------------------------------------
    max_len = int(max(lengths))
    # Packed, time-major logits (the module-faithful return): direct row gather from the
    # flat time-major logits -- no transpose of the (M, V) slab.
    pack_idx = [(t + 1) * B_pad + b_i
                for t in range(max_len) for b_i in range(B) if lengths[b_i] > t]
    packed = logits_flat[jnp.asarray(pack_idx, jnp.int32), :V]

    # Batch-first padded predictions (kept for parity checks / torch-style consumers).
    valid_rows = logits_flat[B_pad:S * B_pad].reshape(T, B_pad, V_pad)
    predictions = jnp.transpose(valid_rows[:, :B, :V], (1, 0, 2))[:, :max_len, :]
    return predictions, packed


# --------------------------------------------------------------------------- params
def init_params(key, embed_dim, hidden_dim, vocab_size):
    E, H, V = embed_dim, hidden_dim, vocab_size
    E_pad, H_pad, V_pad = _round_up(E, 128), _round_up(H, 128), _round_up(V, 128)
    ks = jax.random.split(key, 8)
    embed = 0.1 * jax.random.normal(ks[0], (V, E), jnp.float32)
    w_ih = 0.1 * jax.random.normal(ks[1], (4 * H, E), jnp.float32)
    w_hh = 0.1 * jax.random.normal(ks[2], (4 * H, H), jnp.float32)
    b_ih = 0.1 * jax.random.normal(ks[3], (4 * H,), jnp.float32)
    b_hh = 0.1 * jax.random.normal(ks[4], (4 * H,), jnp.float32)
    # weight_norm(nn.Linear): w = g * v / ||v||_2 (row-wise, dim=0)
    v = 0.1 * jax.random.normal(ks[5], (V, H), jnp.float32)
    g = 1.0 + 0.1 * jax.random.normal(ks[6], (V, 1), jnp.float32)
    w_pred = g * v / jnp.linalg.norm(v, axis=1, keepdims=True)
    b_pred = 0.1 * jax.random.normal(ks[7], (V,), jnp.float32)

    wih_t = _pad_gates(jnp.transpose(w_ih), H, H_pad)                   # (E, 4*H_pad)
    wih_t = jnp.pad(wih_t, ((0, E_pad - E), (0, 0))).astype(jnp.bfloat16)
    whh_t = _pad_gates(jnp.transpose(w_hh), H, H_pad)                   # (H, 4*H_pad)
    whh_t = jnp.pad(whh_t, ((0, H_pad - H), (0, 0))).astype(jnp.bfloat16)
    b = _pad_gates((b_ih + b_hh)[None, :], H, H_pad).astype(jnp.float32)
    wp_t = jnp.pad(jnp.transpose(w_pred),
                   ((0, H_pad - H), (0, V_pad - V))).astype(jnp.bfloat16)
    bp = jnp.pad(b_pred, (0, V_pad - V))[None, :].astype(jnp.float32)
    embed_p = jnp.pad(embed, ((0, 0), (0, E_pad - E))).astype(jnp.bfloat16)

    return dict(embed_p=embed_p, wih_t=wih_t, whh_t=whh_t, b=b, wp_t=wp_t, bp=bp,
                E=E, H=H, V=V, E_pad=E_pad, H_pad=H_pad, V_pad=V_pad)


# --------------------------------------------------------------------------- reference
def reference_forward(params, features, captions, lengths):
    """Plain-JAX replica of the kernel math (same bf16 cast points) for validation.
    NOTE: h is cast to bf16 for the recurrent/projection matmuls (as in the kernel);
    this matches the kernel exactly but can drift slightly from a pure-f32 torch LSTMCell."""
    B = features.shape[0]
    E_pad, Hp, V = params["E_pad"], params["H_pad"], params["V"]
    T = captions.shape[1] - 1
    B_pad = _round_up(max(B, 8), 8)
    feat = jnp.pad(features.astype(jnp.float32),
                   ((0, B_pad - B), (0, E_pad - E_pad + params["E_pad"] - features.shape[1]))
                   if False else ((0, B_pad - B), (0, E_pad - features.shape[1]))
                   ).astype(jnp.bfloat16)
    emb = params["embed_p"][captions[:, :T]]
    emb = jnp.transpose(jnp.pad(emb, ((0, B_pad - B), (0, 0), (0, 0))), (1, 0, 2))
    x_seq = jnp.concatenate([feat[None], emb], axis=0)                  # (S, B_pad, E_pad)
    h = jnp.zeros((B_pad, Hp), jnp.float32)
    c = jnp.zeros((B_pad, Hp), jnp.float32)
    hs = []
    for t in range(T + 1):
        pre = (jnp.dot(x_seq[t], params["wih_t"], preferred_element_type=jnp.float32)
               + params["b"])
        gates = pre + jnp.dot(h.astype(jnp.bfloat16), params["whh_t"],
                              preferred_element_type=jnp.float32)
        i = jax.nn.sigmoid(gates[:, 0 * Hp:1 * Hp])
        f = jax.nn.sigmoid(gates[:, 1 * Hp:2 * Hp])
        g = jnp.tanh(gates[:, 2 * Hp:3 * Hp])
        o = jax.nn.sigmoid(gates[:, 3 * Hp:4 * Hp])
        c = f * c + i * g
        h = o * jnp.tanh(c)
        hs.append(h)
    preds = []
    for t in range(1, T + 1):
        p = (jnp.dot(hs[t].astype(jnp.bfloat16), params["wp_t"],
                     preferred_element_type=jnp.float32) + params["bp"])
        preds.append(p[:B, :V])
    out = jnp.stack(preds, axis=1)                                      # (B, T, V)
    lengths_arr = jnp.asarray(lengths, jnp.int32)
    mask = (lengths_arr[:, None] > jnp.arange(T, dtype=jnp.int32)[None, :])
    out = out * mask[..., None].astype(out.dtype)
    return out[:, :int(max(lengths)), :]


# --------------------------------------------------------------------------- main
if __name__ == "__main__":
    embed_dim, hidden_dim, vocab_size = 32, 32, 128
    B, Tcap = 2, 8
    lengths = [7, 5]                                 # lengths[i] = len(caption_i) - 1

    key = jax.random.PRNGKey(0)
    k_param, k_feat, k_cap = jax.random.split(key, 3)
    params = init_params(k_param, embed_dim, hidden_dim, vocab_size)

    features = jax.random.normal(k_feat, (B, embed_dim), jnp.float32)
    captions = jax.random.randint(k_cap, (B, Tcap), 3, vocab_size, jnp.int32)
    captions = captions.at[:, 0].set(1)                          # <sta>
    captions = captions.at[0, lengths[0]].set(2)                 # <end>
    captions = captions.at[1, lengths[1]].set(2)
    captions = captions.at[1, lengths[1] + 1:].set(0)            # padding

    predictions, packed = decoder_rnn_forward(params, features, captions, lengths)
    predictions = jax.block_until_ready(predictions)
    packed = jax.block_until_ready(packed)

    ref = reference_forward(params, features, captions, lengths)
    ref_packed = jnp.concatenate(
        [ref[:sum(1 for L in lengths if L > t), t, :] for t in range(int(max(lengths)))],
        axis=0)

    assert predictions.shape == (B, max(lengths), vocab_size)
    assert packed.shape == (sum(lengths), vocab_size)
    assert jnp.allclose(predictions, ref, atol=5e-3, rtol=5e-3), "mismatch vs reference"
    assert jnp.allclose(packed, ref_packed, atol=5e-3, rtol=5e-3), "packed mismatch"

    print("KERNEL_OK")
</pallas_src>

<mosaic_0001>
module attributes {stable_mosaic.version = 11 : i64} {
  func.func @matmul_bias_kernel(%arg0: i32, %arg1: i32, %arg2: memref<64x128xbf16, #tpu.memory_space<vmem>>, %arg3: memref<128x512xbf16, #tpu.memory_space<vmem>>, %arg4: memref<1x512xf32, #tpu.memory_space<vmem>>, %arg5: memref<64x512xf32, #tpu.memory_space<vmem>>) attributes {dimension_semantics = [#tpu.dimension_semantics<parallel>, #tpu.dimension_semantics<parallel>], iteration_bounds = array<i64: 1, 1>, scalar_prefetch = 0 : i64, scratch_operands = 0 : i64, tpu.core_type = #tpu.core_type<tc>, window_params = [{transform_indices = @transform_0, window_bounds = array<i64: 64, 128>}, {transform_indices = @transform_1, window_bounds = array<i64: 128, 512>}, {transform_indices = @transform_2, window_bounds = array<i64: 1, 512>}, {transform_indices = @transform_3, window_bounds = array<i64: 64, 512>}]} {
    %c0 = arith.constant 0 : index
    %c0_0 = arith.constant 0 : index
    %0 = vector.load %arg2[%c0, %c0_0] : memref<64x128xbf16, #tpu.memory_space<vmem>>, vector<64x128xbf16>
    %c0_1 = arith.constant 0 : index
    %c0_2 = arith.constant 0 : index
    %1 = vector.load %arg3[%c0_1, %c0_2] : memref<128x512xbf16, #tpu.memory_space<vmem>>, vector<128x512xbf16>
    %cst = arith.constant dense<0.000000e+00> : vector<64x512xf32>
    %2 = tpu.matmul %0, %1, %cst {dimension_numbers = #tpu.dot_dimension_numbers<[1], [0], [0], [1], [0, 0, 1, 1], [], []>} : vector<64x128xbf16>, vector<128x512xbf16>, vector<64x512xf32> -> vector<64x512xf32>
    %c0_3 = arith.constant 0 : index
    %c0_4 = arith.constant 0 : index
    %3 = vector.load %arg4[%c0_3, %c0_4] : memref<1x512xf32, #tpu.memory_space<vmem>>, vector<1x512xf32>
    %4 = vector.broadcast %3 : vector<1x512xf32> to vector<64x512xf32>
    %5 = arith.addf %2, %4 : vector<64x512xf32>
    %c0_5 = arith.constant 0 : index
    %c0_6 = arith.constant 0 : index
    %6 = vector.load %arg5[%c0_5, %c0_6] : memref<64x512xf32, #tpu.memory_space<vmem>>, vector<64x512xf32>
    tpu.vector_store %arg5[%c0_5, %c0_6], %5 {strides = array<i32>} : memref<64x512xf32, #tpu.memory_space<vmem>>, vector<64x512xf32>,
    return
  }
  func.func @transform_0(%arg0: i32, %arg1: i32) -> (i32, i32) {
    %c0_i32 = arith.constant 0 : i32
    %c0_i32_0 = arith.constant 0 : i32
    return %arg1, %c0_i32 : i32, i32
  }
  func.func @transform_1(%arg0: i32, %arg1: i32) -> (i32, i32) {
    %c0_i32 = arith.constant 0 : i32
    %c0_i32_0 = arith.constant 0 : i32
    return %c0_i32, %arg0 : i32, i32
  }
  func.func @transform_2(%arg0: i32, %arg1: i32) -> (i32, i32) {
    %c0_i32 = arith.constant 0 : i32
    %c0_i32_0 = arith.constant 0 : i32
    return %c0_i32, %arg0 : i32, i32
  }
  func.func @transform_3(%arg0: i32, %arg1: i32) -> (i32, i32) {
    %c0_i32 = arith.constant 0 : i32
    return %arg1, %arg0 : i32, i32
  }
}

</mosaic_0001>

<llo_original>
// kernel: tpu_custom_call.1
$region0: #{tpu_custom_call.1}
  #allocation0 [shape = 'u32[]', space=smem, size = 0x4, offset = 0x4, fixed_abs, tag = 'smem constant byte address 0x4 - core index']
  #allocation1 [shape = 'u32[144,128]{1,0:T(1,128)}', space=vmem, size = 0x12000, scoped, tag = 'internal scratch']
  %s0 = inlined_call_operand.hbm [shape: bf16[64,128], index: 0, kind: input, shape index: {}]
  %s1 = inlined_call_operand.hbm [shape: bf16[128,512], index: 1, kind: input, shape index: {}]
  %s2 = inlined_call_operand.hbm [shape: f32[1,512], index: 2, kind: input, shape index: {}]
  %s3 = inlined_call_operand.hbm [shape: f32[64,512], index: 3, kind: output, shape index: {}]
  %s4 = sld [smem:[#allocation0]]
  $region34: #{tpu_custom_call.1} parent=0
    _
  %s6 = ssub.s32 1, %s4
  %s7 = scalar_select 0, %s6, %s4
  $region1: #{tpu_custom_call.1} parent=0
    #allocation2 [shape = 'u8[16384]{0}', space=vmem, size = 0x4000, scoped, tag = 'input window, operand 0, single buffered']
    #allocation3 [shape = 's32[1]{0}', space=sflag, size = 0x4, scoped, tag = 'scoped memory for tpu_custom_call.1']
    #allocation4 [shape = 's32[1]{0}', space=sflag, size = 0x4, scoped, tag = 'scoped memory for tpu_custom_call.1']
    #allocation5 [shape = 'u8[131072]{0}', space=vmem, size = 0x20000, scoped, tag = 'input window, operand 1, single buffered']
    #allocation6 [shape = 's32[1]{0}', space=sflag, size = 0x4, scoped, tag = 'scoped memory for tpu_custom_call.1']
    #allocation7 [shape = 'u8[2048]{0}', space=vmem, size = 0x800, scoped, tag = 'input window, operand 2, single buffered']
    #allocation8 [shape = 'u8[131072]{0}', space=vmem, size = 0x20000, scoped, tag = 'output window, operand 0, single buffered']
    %8 = vsyncpa [#allocation3], 0
    %9 = vsyncpa [#allocation6], 0
    %10 = vsyncpa [#allocation4], 0
    // Predicated region
    $region2: #{tpu_custom_call.1} parent=1 // pred_check
      _
    $region3: #{tpu_custom_call.1} parent=1 // pred_check_branch
      %12 = sbr.rel (0) target = $region5
    $region4: #{tpu_custom_call.1} parent=1 // pred_region
      %s14 = ssub.s32 512, 512
      %15 = vsyncadd [#allocation3], %s14
      %s16 = sshll.u32 [#allocation2], 4
      %s17 = int_to_ptr.vmem [resolvable:$true] %s16
      %22 = dma.hbm_to_vmem [thread:$0]  %s0, 512, %s17, [#allocation3], 64, 64, 4
    $region5: #{tpu_custom_call.1} parent=1 // pred_fallthru
      _
    // Predicated region
    $region6: #{tpu_custom_call.1} parent=1 // pred_check
      _
    $region7: #{tpu_custom_call.1} parent=1 // pred_check_branch
      %24 = sbr.rel (0) target = $region9
    $region8: #{tpu_custom_call.1} parent=1 // pred_region
      %s26 = ssub.s32 4096, 4096
      %27 = vsyncadd [#allocation6], %s26
      %s28 = sshll.u32 [#allocation5], 4
      %s29 = int_to_ptr.vmem [resolvable:$true] %s28
      %34 = dma.hbm_to_vmem [thread:$0]  %s1, 4096, %s29, [#allocation6], 256, 256, 16
    $region9: #{tpu_custom_call.1} parent=1 // pred_fallthru
      _
    // Predicated region
    $region10: #{tpu_custom_call.1} parent=1 // pred_check
      _
    $region11: #{tpu_custom_call.1} parent=1 // pred_check_branch
      %36 = sbr.rel (0) target = $region13
    $region12: #{tpu_custom_call.1} parent=1 // pred_region
      %s38 = ssub.s32 64, 64
      %39 = vsyncadd [#allocation6], %s38
      %s41 = sshll.u32 [#allocation7], 4
      %s42 = int_to_ptr.vmem [resolvable:$true] %s41
      %44 = dma.hbm_to_vmem [thread:$0]  %s2, 64, %s42, [#allocation6]
    $region13: #{tpu_custom_call.1} parent=1 // pred_fallthru
      _
    // Predicated region
    $region14: #{tpu_custom_call.1} parent=1 // pred_check
      _
    $region15: #{tpu_custom_call.1} parent=1 // pred_check_branch
      %46 = sbr.rel (0) target = $region17
    $region16: #{tpu_custom_call.1} parent=1 // pred_region
      %47 = dma.done [#allocation3], 512
    $region17: #{tpu_custom_call.1} parent=1 // pred_fallthru
      _
    // Predicated region
    $region18: #{tpu_custom_call.1} parent=1 // pred_check
      _
    $region19: #{tpu_custom_call.1} parent=1 // pred_check_branch
      %49 = sbr.rel (0) target = $region21
    $region20: #{tpu_custom_call.1} parent=1 // pred_region
      %50 = dma.done [#allocation6], 4096
    $region21: #{tpu_custom_call.1} parent=1 // pred_fallthru
      _
    // Predicated region
    $region22: #{tpu_custom_call.1} parent=1 // pred_check
      _
    $region23: #{tpu_custom_call.1} parent=1 // pred_check_branch
      %52 = sbr.rel (0) target = $region25
    $region24: #{tpu_custom_call.1} parent=1 // pred_region
      %53 = dma.done [#allocation6], 64
    $region25: #{tpu_custom_call.1} parent=1 // pred_fallthru
      _
    %v55 = vld [vmem:[#allocation2] sm:$0xf]
    %v56 = vld [vmem:[#allocation2 + $0x4] sm:$0xf]
    %v57 = vld [vmem:[#allocation2 + $0x8] sm:$0xf]
    %v58 = vld [vmem:[#allocation2 + $0xc] sm:$0xf]
    %v59 = vld [vmem:[#allocation2 + $0x10] sm:$0xf]
    %v60 = vld [vmem:[#allocation2 + $0x14] sm:$0xf]
    %v61 = vld [vmem:[#allocation2 + $0x18] sm:$0xf]
    %v62 = vld [vmem:[#allocation2 + $0x1c] sm:$0xf]
    %v63 = vld [vmem:[#allocation5] sm:$0xff]
    %v64 = vld [vmem:[#allocation5 + $0x8] sm:$0xff]
    %v65 = vld [vmem:[#allocation5 + $0x10] sm:$0xff]
    %v66 = vld [vmem:[#allocation5 + $0x18] sm:$0xff]
    %v67 = vld [vmem:[#allocation5 + $0x20] sm:$0xff]
    %v68 = vld [vmem:[#allocation5 + $0x28] sm:$0xff]
    %v69 = vld [vmem:[#allocation5 + $0x30] sm:$0xff]
    %v70 = vld [vmem:[#allocation5 + $0x38] sm:$0xff]
    %v71 = vld [vmem:[#allocation5 + $0x40] sm:$0xff]
    %v72 = vld [vmem:[#allocation5 + $0x48] sm:$0xff]
    %v73 = vld [vmem:[#allocation5 + $0x50] sm:$0xff]
    %v74 = vld [vmem:[#allocation5 + $0x58] sm:$0xff]
    %v75 = vld [vmem:[#allocation5 + $0x60] sm:$0xff]
    %v76 = vld [vmem:[#allocation5 + $0x68] sm:$0xff]
    %v77 = vld [vmem:[#allocation5 + $0x70] sm:$0xff]
    %v78 = vld [vmem:[#allocation5 + $0x78] sm:$0xff]
    %v79 = vld [vmem:[#allocation5 + $0x80] sm:$0xff]
    %v80 = vld [vmem:[#allocation5 + $0x88] sm:$0xff]
    %v81 = vld [vmem:[#allocation5 + $0x90] sm:$0xff]
    %v82 = vld [vmem:[#allocation5 + $0x98] sm:$0xff]
    %v83 = vld [vmem:[#allocation5 + $0xa0] sm:$0xff]
    %v84 = vld [vmem:[#allocation5 + $0xa8] sm:$0xff]
    %v85 = vld [vmem:[#allocation5 + $0xb0] sm:$0xff]
    %v86 = vld [vmem:[#allocation5 + $0xb8] sm:$0xff]
    %v87 = vld [vmem:[#allocation5 + $0xc0] sm:$0xff]
    %v88 = vld [vmem:[#allocation5 + $0xc8] sm:$0xff]
    %v89 = vld [vmem:[#allocation5 + $0xd0] sm:$0xff]
    %v90 = vld [vmem:[#allocation5 + $0xd8] sm:$0xff]
    %v91 = vld [vmem:[#allocation5 + $0xe0] sm:$0xff]
    %v92 = vld [vmem:[#allocation5 + $0xe8] sm:$0xff]
    %v93 = vld [vmem:[#allocation5 + $0xf0] sm:$0xff]
    %v94 = vld [vmem:[#allocation5 + $0xf8] sm:$0xff]
    %v95 = vld [vmem:[#allocation7] sm:$0xf]
    %v97 = vlaneseq
    %v98 = vshrl.u32 %v97, 7
    %v99 = vsub.s32 0, %v98
    %v100 = vrot.slane %v95, %v99
    %v101 = vlaneseq
    %v102 = vshrl.u32 %v101, 7
    %v103 = vsub.s32 1, %v102
    %v104 = vrot.slane %v95, %v103
    %v105 = vlaneseq
    %v106 = vshrl.u32 %v105, 7
    %v107 = vsub.s32 2, %v106
    %v108 = vrot.slane %v95, %v107
    %v109 = vlaneseq
    %v110 = vshrl.u32 %v109, 7
    %v111 = vsub.s32 3, %v110
    %v112 = vrot.slane %v95, %v111
    %v125 = vunpack.c.l.b16 %v55
    %v126 = vunpack.c.l.b16 %v56
    %v127 = vunpack.c.l.b16 %v57
    %v128 = vunpack.c.l.b16 %v58
    %v129 = vunpack.c.l.b16 %v59
    %v130 = vunpack.c.l.b16 %v60
    %v131 = vunpack.c.l.b16 %v61
    %v132 = vunpack.c.l.b16 %v62
    %v133 = vpack.c.b16 %v126, %v125
    %v134 = vpack.c.b16 %v128, %v127
    %v135 = vpack.c.b16 %v130, %v129
    %v136 = vpack.c.b16 %v132, %v131
    %v173 = vunpack.c.l.b16 %v63
    %v174 = vunpack.c.h.b16 %v63
    %v175 = vunpack.c.l.b16 %v64
    %v176 = vunpack.c.h.b16 %v64
    %v177 = vunpack.c.l.b16 %v65
    %v178 = vunpack.c.h.b16 %v65
    %v179 = vunpack.c.l.b16 %v66
    %v180 = vunpack.c.h.b16 %v66
    %v181 = vunpack.c.l.b16 %v67
    %v182 = vunpack.c.h.b16 %v67
    %v183 = vunpack.c.l.b16 %v68
    %v184 = vunpack.c.h.b16 %v68
    %v185 = vunpack.c.l.b16 %v69
    %v186 = vunpack.c.h.b16 %v69
    %v187 = vunpack.c.l.b16 %v70
    %v188 = vunpack.c.h.b16 %v70
    %v189 = vunpack.c.l.b16 %v71
    %v190 = vunpack.c.h.b16 %v71
    %v191 = vunpack.c.l.b16 %v72
    %v192 = vunpack.c.h.b16 %v72
    %v193 = vunpack.c.l.b16 %v73
    %v194 = vunpack.c.h.b16 %v73
    %v195 = vunpack.c.l.b16 %v74
    %v196 = vunpack.c.h.b16 %v74
    %v197 = vunpack.c.l.b16 %v75
    %v198 = vunpack.c.h.b16 %v75
    %v199 = vunpack.c.l.b16 %v76
    %v200 = vunpack.c.h.b16 %v76
    %v201 = vunpack.c.l.b16 %v77
    %v202 = vunpack.c.h.b16 %v77
    %v203 = vunpack.c.l.b16 %v78
    %v204 = vunpack.c.h.b16 %v78
    %v205 = vunpack.c.l.b16 %v79
    %v206 = vunpack.c.h.b16 %v79
    %v207 = vunpack.c.l.b16 %v80
    %v208 = vunpack.c.h.b16 %v80
    %v209 = vunpack.c.l.b16 %v81
    %v210 = vunpack.c.h.b16 %v81
    %v211 = vunpack.c.l.b16 %v82
    %v212 = vunpack.c.h.b16 %v82
    %v213 = vunpack.c.l.b16 %v83
    %v214 = vunpack.c.h.b16 %v83
    %v215 = vunpack.c.l.b16 %v84
    %v216 = vunpack.c.h.b16 %v84
    %v217 = vunpack.c.l.b16 %v85
    %v218 = vunpack.c.h.b16 %v85
    %v219 = vunpack.c.l.b16 %v86
    %v220 = vunpack.c.h.b16 %v86
    %v221 = vunpack.c.l.b16 %v87
    %v222 = vunpack.c.h.b16 %v87
    %v223 = vunpack.c.l.b16 %v88
    %v224 = vunpack.c.h.b16 %v88
    %v225 = vunpack.c.l.b16 %v89
    %v226 = vunpack.c.h.b16 %v89
    %v227 = vunpack.c.l.b16 %v90
    %v228 = vunpack.c.h.b16 %v90
    %v229 = vunpack.c.l.b16 %v91
    %v230 = vunpack.c.h.b16 %v91
    %v231 = vunpack.c.l.b16 %v92
    %v232 = vunpack.c.h.b16 %v92
    %v233 = vunpack.c.l.b16 %v93
    %v234 = vunpack.c.h.b16 %v93
    %v235 = vunpack.c.l.b16 %v94
    %v236 = vunpack.c.h.b16 %v94
    %v237 = vpack.c.b16 %v177, %v173
    %v238 = vpack.c.b16 %v178, %v174
    %v239 = vpack.c.b16 %v179, %v175
    %v240 = vpack.c.b16 %v180, %v176
    %v241 = vpack.c.b16 %v185, %v181
    %v242 = vpack.c.b16 %v186, %v182
    %v243 = vpack.c.b16 %v187, %v183
    %v244 = vpack.c.b16 %v188, %v184
    %v245 = vpack.c.b16 %v193, %v189
    %v246 = vpack.c.b16 %v194, %v190
    %v247 = vpack.c.b16 %v195, %v191
    %v248 = vpack.c.b16 %v196, %v192
    %v249 = vpack.c.b16 %v201, %v197
    %v250 = vpack.c.b16 %v202, %v198
    %v251 = vpack.c.b16 %v203, %v199
    %v252 = vpack.c.b16 %v204, %v200
    %v253 = vpack.c.b16 %v209, %v205
    %v254 = vpack.c.b16 %v210, %v206
    %v255 = vpack.c.b16 %v211, %v207
    %v256 = vpack.c.b16 %v212, %v208
    %v257 = vpack.c.b16 %v217, %v213
    %v258 = vpack.c.b16 %v218, %v214
    %v259 = vpack.c.b16 %v219, %v215
    %v260 = vpack.c.b16 %v220, %v216
    %v261 = vpack.c.b16 %v225, %v221
    %v262 = vpack.c.b16 %v226, %v222
    %v263 = vpack.c.b16 %v227, %v223
    %v264 = vpack.c.b16 %v228, %v224
    %v265 = vpack.c.b16 %v233, %v229
    %v266 = vpack.c.b16 %v234, %v230
    %v267 = vpack.c.b16 %v235, %v231
    %v268 = vpack.c.b16 %v236, %v232
    %301 = vmatprep.subr.bf16.mxu0 %v266
    %302 = vmatpush1.bf16.msra.mxu0 %v265
    %303 = vmatprep.subr.bf16.mxu0 %v262
    %304 = vmatpush1.bf16.msra.mxu0 %v261
    %305 = vmatprep.subr.bf16.mxu0 %v258
    %306 = vmatpush1.bf16.msra.mxu0 %v257
    %307 = vmatprep.subr.bf16.mxu0 %v254
    %308 = vmatpush1.bf16.msra.mxu0 %v253
    %309 = vmatprep.subr.bf16.mxu0 %v250
    %310 = vmatpush1.bf16.msra.mxu0 %v249
    %311 = vmatprep.subr.bf16.mxu0 %v246
    %312 = vmatpush1.bf16.msra.mxu0 %v245
    %313 = vmatprep.subr.bf16.mxu0 %v242
    %314 = vmatpush1.bf16.msra.mxu0 %v241
    %315 = vmatprep.subr.bf16.mxu0 %v238
    %316 = vmatpush1.bf16.msra.mxu0 %v237
    %317 = vmatprep.subr.bf16.mxu0 0
    %318 = vmatpush2.bf16.msra.mxu0 0
    %319 = vmatprep.subr.bf16.mxu0 0
    %320 = vmatpush2.bf16.msra.mxu0 0
    %321 = vmatprep.subr.bf16.mxu0 0
    %322 = vmatpush2.bf16.msra.mxu0 0
    %323 = vmatprep.subr.bf16.mxu0 0
    %324 = vmatpush2.bf16.msra.mxu0 0
    %325 = vmatprep.subr.bf16.mxu0 0
    %326 = vmatpush2.bf16.msra.mxu0 0
    %327 = vmatprep.subr.bf16.mxu0 0
    %328 = vmatpush2.bf16.msra.mxu0 0
    %329 = vmatprep.subr.bf16.mxu0 0
    %330 = vmatpush2.bf16.msra.mxu0 0
    %331 = vmatprep.subr.bf16.mxu0 0
    %332 = vmatpush2.bf16.msra.mxu0 0
    %333 = vmatprep.mubr.bf16.mxu0 0
    %334 = vmatmul.mubr.bf16.gmra.mxu0 %v133
    %v335 = vpop.f32.mrf.mxu0
    %v336 = vadd.f32 %v100, %v335
    %v337 = vpop.f32.mrf.mxu0
    %v338 = vadd.f32 %v104, %v337
    %v339 = vpop.f32.mrf.mxu0
    %v340 = vadd.f32 %v100, %v339
    %v341 = vpop.f32.mrf.mxu0
    %v342 = vadd.f32 %v104, %v341
    %343 = vmatprep.mubr.bf16.mxu0 0
    %344 = vmatmul.mubr.bf16.gmra.mxu0 %v134
    %v345 = vpop.f32.mrf.mxu0
    %v346 = vadd.f32 %v100, %v345
    %v347 = vpop.f32.mrf.mxu0
    %v348 = vadd.f32 %v104, %v347
    %v349 = vpop.f32.mrf.mxu0
    %v350 = vadd.f32 %v100, %v349
    %v351 = vpop.f32.mrf.mxu0
    %v352 = vadd.f32 %v104, %v351
    %353 = vmatprep.mubr.bf16.mxu0 0
    %354 = vmatmul.mubr.bf16.gmra.mxu0 %v135
    %v355 = vpop.f32.mrf.mxu0
    %v356 = vadd.f32 %v100, %v355
    %v357 = vpop.f32.mrf.mxu0
    %v358 = vadd.f32 %v104, %v357
    %v359 = vpop.f32.mrf.mxu0
    %v360 = vadd.f32 %v100, %v359
    %v361 = vpop.f32.mrf.mxu0
    %v362 = vadd.f32 %v104, %v361
    %363 = vmatprep.mubr.bf16.mxu0 0
    %364 = vmatmul.mubr.bf16.gmra.mxu0 %v136
    %v365 = vpop.f32.mrf.mxu0
    %v366 = vadd.f32 %v100, %v365
    %v367 = vpop.f32.mrf.mxu0
    %v368 = vadd.f32 %v104, %v367
    %v369 = vpop.f32.mrf.mxu0
    %v370 = vadd.f32 %v100, %v369
    %v371 = vpop.f32.mrf.mxu0
    %v372 = vadd.f32 %v104, %v371
    %373 = vdwg.mxu0
    %374 = vmatprep.subr.bf16.mxu0 %v268
    %375 = vmatpush1.bf16.msra.mxu0 %v267
    %376 = vmatprep.subr.bf16.mxu0 %v264
    %377 = vmatpush1.bf16.msra.mxu0 %v263
    %378 = vmatprep.subr.bf16.mxu0 %v260
    %379 = vmatpush1.bf16.msra.mxu0 %v259
    %380 = vmatprep.subr.bf16.mxu0 %v256
    %381 = vmatpush1.bf16.msra.mxu0 %v255
    %382 = vmatprep.subr.bf16.mxu0 %v252
    %383 = vmatpush1.bf16.msra.mxu0 %v251
    %384 = vmatprep.subr.bf16.mxu0 %v248
    %385 = vmatpush1.bf16.msra.mxu0 %v247
    %386 = vmatprep.subr.bf16.mxu0 %v244
    %387 = vmatpush1.bf16.msra.mxu0 %v243
    %388 = vmatprep.subr.bf16.mxu0 %v240
    %389 = vmatpush1.bf16.msra.mxu0 %v239
    %390 = vmatprep.subr.bf16.mxu0 0
    %391 = vmatpush2.bf16.msra.mxu0 0
    %392 = vmatprep.subr.bf16.mxu0 0
    %393 = vmatpush2.bf16.msra.mxu0 0
    %394 = vmatprep.subr.bf16.mxu0 0
    %395 = vmatpush2.bf16.msra.mxu0 0
    %396 = vmatprep.subr.bf16.mxu0 0
    %397 = vmatpush2.bf16.msra.mxu0 0
    %398 = vmatprep.subr.bf16.mxu0 0
    %399 = vmatpush2.bf16.msra.mxu0 0
    %400 = vmatprep.subr.bf16.mxu0 0
    %401 = vmatpush2.bf16.msra.mxu0 0
    %402 = vmatprep.subr.bf16.mxu0 0
    %403 = vmatpush2.bf16.msra.mxu0 0
    %404 = vmatprep.subr.bf16.mxu0 0
    %405 = vmatpush2.bf16.msra.mxu0 0
    %406 = vmatprep.mubr.bf16.mxu0 0
    %407 = vmatmul.mubr.bf16.gmra.mxu0 %v133
    %v408 = vpop.f32.mrf.mxu0
    %v409 = vadd.f32 %v108, %v408
    %v410 = vpop.f32.mrf.mxu0
    %v411 = vadd.f32 %v112, %v410
    %v412 = vpop.f32.mrf.mxu0
    %v413 = vadd.f32 %v108, %v412
    %v414 = vpop.f32.mrf.mxu0
    %v415 = vadd.f32 %v112, %v414
    %416 = vmatprep.mubr.bf16.mxu0 0
    %417 = vmatmul.mubr.bf16.gmra.mxu0 %v134
    %v418 = vpop.f32.mrf.mxu0
    %v419 = vadd.f32 %v108, %v418
    %v420 = vpop.f32.mrf.mxu0
    %v421 = vadd.f32 %v112, %v420
    %v422 = vpop.f32.mrf.mxu0
    %v423 = vadd.f32 %v108, %v422
    %v424 = vpop.f32.mrf.mxu0
    %v425 = vadd.f32 %v112, %v424
    %426 = vmatprep.mubr.bf16.mxu0 0
    %427 = vmatmul.mubr.bf16.gmra.mxu0 %v135
    %v428 = vpop.f32.mrf.mxu0
    %v429 = vadd.f32 %v108, %v428
    %v430 = vpop.f32.mrf.mxu0
    %v431 = vadd.f32 %v112, %v430
    %v432 = vpop.f32.mrf.mxu0
    %v433 = vadd.f32 %v108, %v432
    %v434 = vpop.f32.mrf.mxu0
    %v435 = vadd.f32 %v112, %v434
    %436 = vmatprep.mubr.bf16.mxu0 0
    %437 = vmatmul.mubr.bf16.gmra.mxu0 %v136
    %v438 = vpop.f32.mrf.mxu0
    %v439 = vadd.f32 %v108, %v438
    %v440 = vpop.f32.mrf.mxu0
    %v441 = vadd.f32 %v112, %v440
    %v442 = vpop.f32.mrf.mxu0
    %v443 = vadd.f32 %v108, %v442
    %v444 = vpop.f32.mrf.mxu0
    %v445 = vadd.f32 %v112, %v444
    %446 = vdwg.mxu0
    %447 = vst [vmem:[#allocation8] sm:$0xff] %v336
    %448 = vst [vmem:[#allocation8 + $0x8] sm:$0xff] %v338
    %449 = vst [vmem:[#allocation8 + $0x10] sm:$0xff] %v409
    %450 = vst [vmem:[#allocation8 + $0x18] sm:$0xff] %v411
    %451 = vst [vmem:[#allocation8 + $0x20] sm:$0xff] %v340
    %452 = vst [vmem:[#allocation8 + $0x28] sm:$0xff] %v342
    %453 = vst [vmem:[#allocation8 + $0x30] sm:$0xff] %v413
    %454 = vst [vmem:[#allocation8 + $0x38] sm:$0xff] %v415
    %455 = vst [vmem:[#allocation8 + $0x40] sm:$0xff] %v346
    %456 = vst [vmem:[#allocation8 + $0x48] sm:$0xff] %v348
    %457 = vst [vmem:[#allocation8 + $0x50] sm:$0xff] %v419
    %458 = vst [vmem:[#allocation8 + $0x58] sm:$0xff] %v421
    %459 = vst [vmem:[#allocation8 + $0x60] sm:$0xff] %v350
    %460 = vst [vmem:[#allocation8 + $0x68] sm:$0xff] %v352
    %461 = vst [vmem:[#allocation8 + $0x70] sm:$0xff] %v423
    %462 = vst [vmem:[#allocation8 + $0x78] sm:$0xff] %v425
    %463 = vst [vmem:[#allocation8 + $0x80] sm:$0xff] %v356
    %464 = vst [vmem:[#allocation8 + $0x88] sm:$0xff] %v358
    %465 = vst [vmem:[#allocation8 + $0x90] sm:$0xff] %v429
    %466 = vst [vmem:[#allocation8 + $0x98] sm:$0xff] %v431
    %467 = vst [vmem:[#allocation8 + $0xa0] sm:$0xff] %v360
    %468 = vst [vmem:[#allocation8 + $0xa8] sm:$0xff] %v362
    %469 = vst [vmem:[#allocation8 + $0xb0] sm:$0xff] %v433
    %470 = vst [vmem:[#allocation8 + $0xb8] sm:$0xff] %v435
    %471 = vst [vmem:[#allocation8 + $0xc0] sm:$0xff] %v366
    %472 = vst [vmem:[#allocation8 + $0xc8] sm:$0xff] %v368
    %473 = vst [vmem:[#allocation8 + $0xd0] sm:$0xff] %v439
    %474 = vst [vmem:[#allocation8 + $0xd8] sm:$0xff] %v441
    %475 = vst [vmem:[#allocation8 + $0xe0] sm:$0xff] %v370
    %476 = vst [vmem:[#allocation8 + $0xe8] sm:$0xff] %v372
    %477 = vst [vmem:[#allocation8 + $0xf0] sm:$0xff] %v443
    %478 = vst [vmem:[#allocation8 + $0xf8] sm:$0xff] %v445
    // Predicated region
    $region26: #{tpu_custom_call.1} parent=1 // pred_check
      _
    $region27: #{tpu_custom_call.1} parent=1 // pred_check_branch
      %480 = sbr.rel (0) target = $region29
    $region28: #{tpu_custom_call.1} parent=1 // pred_region
      %s482 = ssub.s32 4096, 4096
      %483 = vsyncadd [#allocation4], %s482
      %s484 = sshll.u32 [#allocation8], 4
      %s485 = int_to_ptr.vmem [resolvable:$true] %s484
      %490 = dma.vmem_to_hbm [thread:$0]  %s485, 4096, %s3, [#allocation4], 512, 512, 32
    $region29: #{tpu_custom_call.1} parent=1 // pred_fallthru
      _
    // Predicated region
    $region30: #{tpu_custom_call.1} parent=1 // pred_check
      _
    $region31: #{tpu_custom_call.1} parent=1 // pred_check_branch
      %492 = sbr.rel (0) target = $region33
    $region32: #{tpu_custom_call.1} parent=1 // pred_region
      %493 = dma.done [#allocation4], 4096
    $region33: #{tpu_custom_call.1} parent=1 // pred_fallthru
      _
    %494 = vsyncpa [#allocation3], 1
    %495 = vsyncpa [#allocation6], 1
    %496 = vsyncpa [#allocation4], 1

</llo_original>
